<compile_context>
chip_gen: v5e
topology: v5e:2x2
jax: 0.10.0
libtpu: 0.0.40
codegen_flags: <defaults>
</compile_context>

<pallas_src>
import jax
import jax.numpy as jnp
from jax import lax
from jax.experimental import pallas as pl
from jax.experimental.pallas import tpu as pltpu  # noqa: F401  (TPU backend)

# ---- problem sizes (small, consistent with the module) ----------------------
BATCH = 2
MAX_NBR = 8
HIDDEN = 32
NUM_HEADS = 4
ATT_SIZE = HIDDEN // NUM_HEADS  # 8
NEG_INF = -1e30


def attention_kernel(q_ref, kf_ref, vf_ref,
                     wqb_ref, wk_ref, wv_ref, wo_ref, bo_ref,
                     expand_ref, hmask_ref, bbias_ref, comb_ref,
                     o_ref):
    # ---- fused projections across the whole batch (single matmul each) ------
    # wqb = Wq^T @ blockdiag(Wb^T), so qb already carries the bilinear transform.
    qb = jnp.dot(q_ref[...], wqb_ref[...], preferred_element_type=jnp.float32)   # (B, D)
    kh = jnp.dot(kf_ref[...], wk_ref[...], preferred_element_type=jnp.float32)   # (B*M, D)
    vh = jnp.dot(vf_ref[...], wv_ref[...], preferred_element_type=jnp.float32)   # (B*M, D)

    # One row per (batch, head): expand qb over heads and keep only that head's
    # columns (hmask).  expand/hmask are tiny precomputed constants.
    q_rows = jnp.dot(expand_ref[...], qb, preferred_element_type=jnp.float32)    # (B*H, D)
    q_rows = q_rows * hmask_ref[...]

    # Scores of every (batch, head) row against every (batch, nbr) column in a
    # single matmul; cross-batch pairs are pushed to -inf by the additive bias.
    s = lax.dot_general(q_rows, kh, (((1,), (1,)), ((), ())),
                        preferred_element_type=jnp.float32)                      # (B*H, B*M)
    s = s + bbias_ref[...]

    # Softmax over neighbors (lane axis), vectorized over all batch*head rows.
    s = s - jnp.max(s, axis=-1, keepdims=True)
    p = jnp.exp(s)
    p = p * pl.reciprocal(jnp.sum(p, axis=-1, keepdims=True), approx=True)
    # TODO(synk): training-mode att_dropout would go here (identity in eval).

    # Weighted sum of values; select each row's own head columns, then combine
    # the H rows of each batch element back into one (B, D) context vector.
    ctx = jnp.dot(p, vh, preferred_element_type=jnp.float32)                     # (B*H, D)
    ctx = ctx * hmask_ref[...]
    ctx = jnp.dot(comb_ref[...], ctx, preferred_element_type=jnp.float32)        # (B, D)

    # Output projection + bias; single lane-dense store of the whole batch.
    y = jnp.dot(ctx, wo_ref[...], preferred_element_type=jnp.float32) + bo_ref[...]
    o_ref[...] = y.astype(o_ref.dtype)


@jax.jit
def attention_forward(q, k, v, params):
    """q: (B, hidden), k/v: (B, MAX_NBR, hidden) -> (B, hidden)."""
    wq_t, wk_t, wv_t, wb_t, wo_t, bo = params
    B, hidden = q.shape
    max_n = k.shape[1]
    H, A = NUM_HEADS, ATT_SIZE
    dt = q.dtype

    # ---- one-time tiny constants / offline weight folding -------------------
    # Fold the (shared) bilinear weight into the query projection.
    wqb = wq_t @ jnp.kron(jnp.eye(H, dtype=dt), wb_t)                      # (D, D)
    # Row b*H+h of `expand` selects batch b; `hmask` keeps head h's columns.
    expand = jnp.repeat(jnp.eye(B, dtype=dt), H, axis=0)                   # (B*H, B)
    hmask = jnp.tile(jnp.kron(jnp.eye(H, dtype=dt),
                              jnp.ones((1, A), dt)), (B, 1))               # (B*H, D)
    # Additive score bias: 0 for same-batch (row, column), -inf otherwise.
    bbias = (1.0 - jnp.kron(jnp.eye(B, dtype=dt),
                            jnp.ones((H, max_n), dt))) * NEG_INF           # (B*H, B*M)
    # Sum the H head-rows of each batch element back into one row.
    comb = jnp.kron(jnp.eye(B, dtype=dt), jnp.ones((1, H), dt))            # (B, B*H)

    kflat = k.reshape(B * max_n, hidden)
    vflat = v.reshape(B * max_n, hidden)
    bo2 = bo.reshape(1, hidden)

    # Single kernel invocation (no grid): every operand is a full-array VMEM
    # block fetched exactly once; one output store.  For large B, switch to a
    # batch-blocked grid with dimension_semantics=("parallel",).
    out = pl.pallas_call(
        attention_kernel,
        out_shape=jax.ShapeDtypeStruct((B, hidden), jnp.float32),
    )(q, kflat, vflat, wqb, wk_t, wv_t, wo_t, bo2,
      expand, hmask, bbias, comb)
    return out


def reference_forward(q, k, v, params):
    """Pure-JAX replica of the PyTorch module forward (eval mode)."""
    wq_t, wk_t, wv_t, wb_t, wo_t, bo = params
    B = q.shape[0]
    qh = (q[:, None, :] @ wq_t).reshape(B, 1, NUM_HEADS, ATT_SIZE)
    kh = (k @ wk_t).reshape(B, -1, NUM_HEADS, ATT_SIZE)
    vh = (v @ wv_t).reshape(B, -1, NUM_HEADS, ATT_SIZE)
    qh = jnp.transpose(qh, (0, 2, 1, 3))                 # (B, H, 1, A)
    khT = jnp.transpose(kh, (0, 2, 3, 1))                # (B, H, A, M)
    vh = jnp.transpose(vh, (0, 2, 1, 3))                 # (B, H, M, A)
    qb = qh @ wb_t                                       # (B, H, 1, A)
    s = qb @ khT                                         # (B, H, 1, M)
    p = jax.nn.softmax(s, axis=3)
    x = p @ vh                                           # (B, H, 1, A)
    x = jnp.transpose(x, (0, 2, 1, 3)).reshape(B, NUM_HEADS * ATT_SIZE)
    return x @ wo_t + bo


def init_params(key):
    ks = jax.random.split(key, 6)
    def u(k, shape, fan_in):
        bound = 1.0 / jnp.sqrt(fan_in)
        return jax.random.uniform(k, shape, jnp.float32, -bound, bound)
    # Stored directly in (in, out) layout (i.e. PyTorch weight transposed).
    wq_t = u(ks[0], (HIDDEN, NUM_HEADS * ATT_SIZE), HIDDEN)
    wk_t = u(ks[1], (HIDDEN, NUM_HEADS * ATT_SIZE), HIDDEN)
    wv_t = u(ks[2], (HIDDEN, NUM_HEADS * ATT_SIZE), HIDDEN)
    wb_t = u(ks[3], (ATT_SIZE, ATT_SIZE), ATT_SIZE)
    wo_t = u(ks[4], (NUM_HEADS * ATT_SIZE, HIDDEN), NUM_HEADS * ATT_SIZE)
    bo = u(ks[5], (HIDDEN,), NUM_HEADS * ATT_SIZE)
    return (wq_t, wk_t, wv_t, wb_t, wo_t, bo)


if __name__ == "__main__":
    key = jax.random.PRNGKey(0)
    kp, kq, kk, kv = jax.random.split(key, 4)
    params = init_params(kp)

    q = jax.random.normal(kq, (BATCH, HIDDEN), jnp.float32)
    k = jax.random.normal(kk, (BATCH, MAX_NBR, HIDDEN), jnp.float32)
    v = jax.random.normal(kv, (BATCH, MAX_NBR, HIDDEN), jnp.float32)

    out = attention_forward(q, k, v, params)
    out = jax.block_until_ready(out)

    ref = reference_forward(q, k, v, params)
    assert out.shape == (BATCH, HIDDEN)
    # pl.reciprocal(approx=True) in the softmax adds ~1e-3 relative error vs
    # the exact reference math, hence the slightly relaxed tolerance.
    assert jnp.allclose(out, ref, atol=2e-3, rtol=2e-3), "mismatch vs reference"

    print("KERNEL_OK")
</pallas_src>

<mosaic_0001>
module attributes {stable_mosaic.version = 11 : i64} {
  func.func @attention_kernel(%arg0: memref<2x32xf32, #tpu.memory_space<vmem>>, %arg1: memref<16x32xf32, #tpu.memory_space<vmem>>, %arg2: memref<16x32xf32, #tpu.memory_space<vmem>>, %arg3: memref<32x32xf32, #tpu.memory_space<vmem>>, %arg4: memref<32x32xf32, #tpu.memory_space<vmem>>, %arg5: memref<32x32xf32, #tpu.memory_space<vmem>>, %arg6: memref<32x32xf32, #tpu.memory_space<vmem>>, %arg7: memref<1x32xf32, #tpu.memory_space<vmem>>, %arg8: memref<8x2xf32, #tpu.memory_space<vmem>>, %arg9: memref<8x32xf32, #tpu.memory_space<vmem>>, %arg10: memref<8x16xf32, #tpu.memory_space<vmem>>, %arg11: memref<2x8xf32, #tpu.memory_space<vmem>>, %arg12: memref<2x32xf32, #tpu.memory_space<vmem>>) attributes {dimension_semantics = [], scalar_prefetch = 0 : i64, scratch_operands = 0 : i64, tpu.core_type = #tpu.core_type<tc>} {
    %c0 = arith.constant 0 : index
    %c0_0 = arith.constant 0 : index
    %0 = vector.load %arg0[%c0, %c0_0] : memref<2x32xf32, #tpu.memory_space<vmem>>, vector<2x32xf32>
    %c0_1 = arith.constant 0 : index
    %c0_2 = arith.constant 0 : index
    %1 = vector.load %arg3[%c0_1, %c0_2] : memref<32x32xf32, #tpu.memory_space<vmem>>, vector<32x32xf32>
    %cst = arith.constant dense<0.000000e+00> : vector<2x32xf32>
    %2 = tpu.matmul %0, %1, %cst {dimension_numbers = #tpu.dot_dimension_numbers<[1], [0], [0], [1], [0, 0, 1, 1], [], []>} : vector<2x32xf32>, vector<32x32xf32>, vector<2x32xf32> -> vector<2x32xf32>
    %c0_3 = arith.constant 0 : index
    %c0_4 = arith.constant 0 : index
    %3 = vector.load %arg1[%c0_3, %c0_4] : memref<16x32xf32, #tpu.memory_space<vmem>>, vector<16x32xf32>
    %c0_5 = arith.constant 0 : index
    %c0_6 = arith.constant 0 : index
    %4 = vector.load %arg4[%c0_5, %c0_6] : memref<32x32xf32, #tpu.memory_space<vmem>>, vector<32x32xf32>
    %cst_7 = arith.constant dense<0.000000e+00> : vector<16x32xf32>
    %5 = tpu.matmul %3, %4, %cst_7 {dimension_numbers = #tpu.dot_dimension_numbers<[1], [0], [0], [1], [0, 0, 1, 1], [], []>} : vector<16x32xf32>, vector<32x32xf32>, vector<16x32xf32> -> vector<16x32xf32>
    %c0_8 = arith.constant 0 : index
    %c0_9 = arith.constant 0 : index
    %6 = vector.load %arg2[%c0_8, %c0_9] : memref<16x32xf32, #tpu.memory_space<vmem>>, vector<16x32xf32>
    %c0_10 = arith.constant 0 : index
    %c0_11 = arith.constant 0 : index
    %7 = vector.load %arg5[%c0_10, %c0_11] : memref<32x32xf32, #tpu.memory_space<vmem>>, vector<32x32xf32>
    %cst_12 = arith.constant dense<0.000000e+00> : vector<16x32xf32>
    %8 = tpu.matmul %6, %7, %cst_12 {dimension_numbers = #tpu.dot_dimension_numbers<[1], [0], [0], [1], [0, 0, 1, 1], [], []>} : vector<16x32xf32>, vector<32x32xf32>, vector<16x32xf32> -> vector<16x32xf32>
    %c0_13 = arith.constant 0 : index
    %c0_14 = arith.constant 0 : index
    %9 = vector.load %arg8[%c0_13, %c0_14] : memref<8x2xf32, #tpu.memory_space<vmem>>, vector<8x2xf32>
    %cst_15 = arith.constant dense<0.000000e+00> : vector<8x32xf32>
    %10 = tpu.matmul %9, %2, %cst_15 {dimension_numbers = #tpu.dot_dimension_numbers<[1], [0], [0], [1], [0, 0, 1, 1], [], []>} : vector<8x2xf32>, vector<2x32xf32>, vector<8x32xf32> -> vector<8x32xf32>
    %c0_16 = arith.constant 0 : index
    %c0_17 = arith.constant 0 : index
    %11 = vector.load %arg9[%c0_16, %c0_17] : memref<8x32xf32, #tpu.memory_space<vmem>>, vector<8x32xf32>
    %12 = arith.mulf %10, %11 : vector<8x32xf32>
    %cst_18 = arith.constant dense<0.000000e+00> : vector<8x16xf32>
    %13 = tpu.matmul %12, %5, %cst_18 {dimension_numbers = #tpu.dot_dimension_numbers<[1], [1], [0], [0], [0, 0, 1, 0], [], []>} : vector<8x32xf32>, vector<16x32xf32>, vector<8x16xf32> -> vector<8x16xf32>
    %c0_19 = arith.constant 0 : index
    %c0_20 = arith.constant 0 : index
    %14 = vector.load %arg10[%c0_19, %c0_20] : memref<8x16xf32, #tpu.memory_space<vmem>>, vector<8x16xf32>
    %15 = arith.addf %13, %14 : vector<8x16xf32>
    %cst_21 = arith.constant dense<0xFF800000> : vector<8xf32>
    %16 = vector.multi_reduction <maximumf>, %15, %cst_21 [1] : vector<8x16xf32> to vector<8xf32>
    %17 = vector.shape_cast %16 : vector<8xf32> to vector<8x1xf32>
    %18 = vector.broadcast %17 : vector<8x1xf32> to vector<8x16xf32>
    %19 = arith.subf %15, %18 : vector<8x16xf32>
    %20 = math.exp %19 : vector<8x16xf32>
    %cst_22 = arith.constant dense<0.000000e+00> : vector<8xf32>
    %21 = vector.multi_reduction <add>, %20, %cst_22 [1] : vector<8x16xf32> to vector<8xf32>
    %22 = vector.shape_cast %21 : vector<8xf32> to vector<8x1xf32>
    %23 = tpu.reciprocal %22 {approx = true} : vector<8x1xf32> -> vector<8x1xf32>
    %24 = vector.broadcast %23 : vector<8x1xf32> to vector<8x16xf32>
    %25 = arith.mulf %20, %24 : vector<8x16xf32>
    %cst_23 = arith.constant dense<0.000000e+00> : vector<8x32xf32>
    %26 = tpu.matmul %25, %8, %cst_23 {dimension_numbers = #tpu.dot_dimension_numbers<[1], [0], [0], [1], [0, 0, 1, 1], [], []>} : vector<8x16xf32>, vector<16x32xf32>, vector<8x32xf32> -> vector<8x32xf32>
    %c0_24 = arith.constant 0 : index
    %c0_25 = arith.constant 0 : index
    %27 = vector.load %arg9[%c0_24, %c0_25] : memref<8x32xf32, #tpu.memory_space<vmem>>, vector<8x32xf32>
    %28 = arith.mulf %26, %27 : vector<8x32xf32>
    %c0_26 = arith.constant 0 : index
    %c0_27 = arith.constant 0 : index
    %29 = vector.load %arg11[%c0_26, %c0_27] : memref<2x8xf32, #tpu.memory_space<vmem>>, vector<2x8xf32>
    %cst_28 = arith.constant dense<0.000000e+00> : vector<2x32xf32>
    %30 = tpu.matmul %29, %28, %cst_28 {dimension_numbers = #tpu.dot_dimension_numbers<[1], [0], [0], [1], [0, 0, 1, 1], [], []>} : vector<2x8xf32>, vector<8x32xf32>, vector<2x32xf32> -> vector<2x32xf32>
    %c0_29 = arith.constant 0 : index
    %c0_30 = arith.constant 0 : index
    %31 = vector.load %arg6[%c0_29, %c0_30] : memref<32x32xf32, #tpu.memory_space<vmem>>, vector<32x32xf32>
    %cst_31 = arith.constant dense<0.000000e+00> : vector<2x32xf32>
    %32 = tpu.matmul %30, %31, %cst_31 {dimension_numbers = #tpu.dot_dimension_numbers<[1], [0], [0], [1], [0, 0, 1, 1], [], []>} : vector<2x32xf32>, vector<32x32xf32>, vector<2x32xf32> -> vector<2x32xf32>
    %c0_32 = arith.constant 0 : index
    %c0_33 = arith.constant 0 : index
    %33 = vector.load %arg7[%c0_32, %c0_33] : memref<1x32xf32, #tpu.memory_space<vmem>>, vector<1x32xf32>
    %34 = vector.broadcast %33 : vector<1x32xf32> to vector<2x32xf32>
    %35 = arith.addf %32, %34 : vector<2x32xf32>
    %c0_34 = arith.constant 0 : index
    %c0_35 = arith.constant 0 : index
    %36 = vector.load %arg12[%c0_34, %c0_35] : memref<2x32xf32, #tpu.memory_space<vmem>>, vector<2x32xf32>
    tpu.vector_store %arg12[%c0_34, %c0_35], %35 {strides = array<i32>} : memref<2x32xf32, #tpu.memory_space<vmem>>, vector<2x32xf32>,
    return
  }
}

</mosaic_0001>

<llo_original>
// kernel: attention_forward.1
$region0: #{attention_forward.1}
  #allocation0 [shape = 'u32[]', space=smem, size = 0x4, offset = 0x4, fixed_abs, tag = 'smem constant byte address 0x4 - core index']
  #allocation1 [shape = 'u32[72,128]{1,0:T(1,128)}', space=vmem, size = 0x9000, scoped, tag = 'internal scratch']
  %s0 = inlined_call_operand.vmem [shape: f32[2,32], index: 0, kind: input, shape index: {}]
  %s1 = inlined_call_operand.vmem [shape: f32[16,32], index: 1, kind: input, shape index: {}]
  %s2 = inlined_call_operand.vmem [shape: f32[16,32], index: 2, kind: input, shape index: {}]
  %s3 = inlined_call_operand.vmem [shape: f32[32,32], index: 3, kind: input, shape index: {}]
  %s4 = inlined_call_operand.vmem [shape: f32[32,32], index: 4, kind: input, shape index: {}]
  %s5 = inlined_call_operand.vmem [shape: f32[32,32], index: 5, kind: input, shape index: {}]
  %s6 = inlined_call_operand.vmem [shape: f32[32,32], index: 6, kind: input, shape index: {}]
  %s7 = inlined_call_operand.vmem [shape: f32[1,32], index: 7, kind: input, shape index: {}]
  %s8 = inlined_call_operand.vmem [shape: f32[8,2], index: 8, kind: input, shape index: {}]
  %s9 = inlined_call_operand.vmem [shape: f32[8,32], index: 9, kind: input, shape index: {}]
  %s10 = inlined_call_operand.vmem [shape: f32[8,16], index: 10, kind: input, shape index: {}]
  %s11 = inlined_call_operand.vmem [shape: f32[2,8], index: 11, kind: input, shape index: {}]
  %s12 = inlined_call_operand.hbm [shape: f32[2,32], index: 12, kind: output, shape index: {}]
  %s13 = sld [smem:[#allocation0]]
  $region58: #{attention_forward.1} parent=0
    _
  %s15 = ssub.s32 1, %s13
  %s16 = scalar_select 0, %s15, %s13
  $region1: #{attention_forward.1} parent=0
    #allocation2 [shape = 'u8[1024]{0}', space=vmem, size = 0x400, scoped, tag = 'output window, operand 0, single buffered']
    #allocation3 [shape = 's32[1]{0}', space=sflag, size = 0x4, scoped, tag = 'scoped memory for attention_forward.1']
    %17 = vsyncpa [#allocation3], 0
    // Predicated region
    $region2: #{attention_forward.1} parent=1 // pred_check
      _
    $region3: #{attention_forward.1} parent=1 // pred_check_branch
      %19 = sbr.rel (0) target = $region5
    $region4: #{attention_forward.1} parent=1 // pred_region
      _
    $region5: #{attention_forward.1} parent=1 // pred_fallthru
      _
    // Predicated region
    $region6: #{attention_forward.1} parent=1 // pred_check
      _
    $region7: #{attention_forward.1} parent=1 // pred_check_branch
      %21 = sbr.rel (0) target = $region9
    $region8: #{attention_forward.1} parent=1 // pred_region
      _
    $region9: #{attention_forward.1} parent=1 // pred_fallthru
      _
    // Predicated region
    $region10: #{attention_forward.1} parent=1 // pred_check
      _
    $region11: #{attention_forward.1} parent=1 // pred_check_branch
      %23 = sbr.rel (0) target = $region13
    $region12: #{attention_forward.1} parent=1 // pred_region
      _
    $region13: #{attention_forward.1} parent=1 // pred_fallthru
      _
    // Predicated region
    $region14: #{attention_forward.1} parent=1 // pred_check
      _
    $region15: #{attention_forward.1} parent=1 // pred_check_branch
      %25 = sbr.rel (0) target = $region17
    $region16: #{attention_forward.1} parent=1 // pred_region
      _
    $region17: #{attention_forward.1} parent=1 // pred_fallthru
      _
    // Predicated region
    $region18: #{attention_forward.1} parent=1 // pred_check
      _
    $region19: #{attention_forward.1} parent=1 // pred_check_branch
      %27 = sbr.rel (0) target = $region21
    $region20: #{attention_forward.1} parent=1 // pred_region
      _
    $region21: #{attention_forward.1} parent=1 // pred_fallthru
      _
    // Predicated region
    $region22: #{attention_forward.1} parent=1 // pred_check
      _
    $region23: #{attention_forward.1} parent=1 // pred_check_branch
      %29 = sbr.rel (0) target = $region25
    $region24: #{attention_forward.1} parent=1 // pred_region
      _
    $region25: #{attention_forward.1} parent=1 // pred_fallthru
      _
    // Predicated region
    $region26: #{attention_forward.1} parent=1 // pred_check
      _
    $region27: #{attention_forward.1} parent=1 // pred_check_branch
      %31 = sbr.rel (0) target = $region29
    $region28: #{attention_forward.1} parent=1 // pred_region
      _
    $region29: #{attention_forward.1} parent=1 // pred_fallthru
      _
    // Predicated region
    $region30: #{attention_forward.1} parent=1 // pred_check
      _
    $region31: #{attention_forward.1} parent=1 // pred_check_branch
      %33 = sbr.rel (0) target = $region33
    $region32: #{attention_forward.1} parent=1 // pred_region
      _
    $region33: #{attention_forward.1} parent=1 // pred_fallthru
      _
    // Predicated region
    $region34: #{attention_forward.1} parent=1 // pred_check
      _
    $region35: #{attention_forward.1} parent=1 // pred_check_branch
      %35 = sbr.rel (0) target = $region37
    $region36: #{attention_forward.1} parent=1 // pred_region
      _
    $region37: #{attention_forward.1} parent=1 // pred_fallthru
      _
    // Predicated region
    $region38: #{attention_forward.1} parent=1 // pred_check
      _
    $region39: #{attention_forward.1} parent=1 // pred_check_branch
      %37 = sbr.rel (0) target = $region41
    $region40: #{attention_forward.1} parent=1 // pred_region
      _
    $region41: #{attention_forward.1} parent=1 // pred_fallthru
      _
    // Predicated region
    $region42: #{attention_forward.1} parent=1 // pred_check
      _
    $region43: #{attention_forward.1} parent=1 // pred_check_branch
      %39 = sbr.rel (0) target = $region45
    $region44: #{attention_forward.1} parent=1 // pred_region
      _
    $region45: #{attention_forward.1} parent=1 // pred_fallthru
      _
    // Predicated region
    $region46: #{attention_forward.1} parent=1 // pred_check
      _
    $region47: #{attention_forward.1} parent=1 // pred_check_branch
      %41 = sbr.rel (0) target = $region49
    $region48: #{attention_forward.1} parent=1 // pred_region
      _
    $region49: #{attention_forward.1} parent=1 // pred_fallthru
      _
    %v42 = vld [vmem:[%s0] sm:$0x3]
    %v43 = vld [vmem:[%s3] sm:$0xff]
    %v44 = vld [vmem:[%s3 + $0x8] sm:$0xff]
    %v45 = vld [vmem:[%s3 + $0x10] sm:$0xff]
    %v46 = vld [vmem:[%s3 + $0x18] sm:$0xff]
    %vm47 = vcmask 261120
    %v49 = vsel %vm47, %v42, 0
    %51 = vmatpush.msra.mxu0 0.0
    %52 = vmatpush.msra.mxu0 0.0
    %53 = vmatpush.msra.mxu0 0.0
    %54 = vmatpush.msra.mxu0 0.0
    %55 = vmatpush.msra.mxu0 0.0
    %56 = vmatpush.msra.mxu0 0.0
    %57 = vmatpush.msra.mxu0 0.0
    %58 = vmatpush.msra.mxu0 0.0
    %59 = vmatpush.msra.mxu0 0.0
    %60 = vmatpush.msra.mxu0 0.0
    %61 = vmatpush.msra.mxu0 0.0
    %62 = vmatpush.msra.mxu0 0.0
    %63 = vmatpush.msra.mxu0 %v46
    %64 = vmatpush.msra.mxu0 %v45
    %65 = vmatpush.msra.mxu0 %v44
    %66 = vmatpush.msra.mxu0 %v43
    %67 = vmatmul.f32.gmra.mxu0 %v49
    %v68 = vpop.f32.mrf.mxu0
    %v69 = vadd.f32 0.0, %v68
    %70 = vdwg.mxu0
    %v71 = vld [vmem:[%s1] sm:$0xff]
    %v72 = vld [vmem:[%s1 + $0x8] sm:$0xff]
    %v73 = vld [vmem:[%s4] sm:$0xff]
    %v74 = vld [vmem:[%s4 + $0x8] sm:$0xff]
    %v75 = vld [vmem:[%s4 + $0x10] sm:$0xff]
    %v76 = vld [vmem:[%s4 + $0x18] sm:$0xff]
    %v78 = vsel %vm47, %v71, 0
    %v81 = vsel %vm47, %v72, 0
    %83 = vmatpush.msra.mxu0 0.0
    %84 = vmatpush.msra.mxu0 0.0
    %85 = vmatpush.msra.mxu0 0.0
    %86 = vmatpush.msra.mxu0 0.0
    %87 = vmatpush.msra.mxu0 0.0
    %88 = vmatpush.msra.mxu0 0.0
    %89 = vmatpush.msra.mxu0 0.0
    %90 = vmatpush.msra.mxu0 0.0
    %91 = vmatpush.msra.mxu0 0.0
    %92 = vmatpush.msra.mxu0 0.0
    %93 = vmatpush.msra.mxu0 0.0
    %94 = vmatpush.msra.mxu0 0.0
    %95 = vmatpush.msra.mxu0 %v76
    %96 = vmatpush.msra.mxu0 %v75
    %97 = vmatpush.msra.mxu0 %v74
    %98 = vmatpush.msra.mxu0 %v73
    %99 = vmatmul.f32.gmra.mxu0 %v78
    %v100 = vpop.f32.mrf.mxu0
    %v101 = vadd.f32 0.0, %v100
    %102 = vmatmul.f32.gmra.mxu0 %v81
    %v103 = vpop.f32.mrf.mxu0
    %v104 = vadd.f32 0.0, %v103
    %105 = vdwg.mxu0
    %v106 = vld [vmem:[%s2] sm:$0xff]
    %v107 = vld [vmem:[%s2 + $0x8] sm:$0xff]
    %v108 = vld [vmem:[%s5] sm:$0xff]
    %v109 = vld [vmem:[%s5 + $0x8] sm:$0xff]
    %v110 = vld [vmem:[%s5 + $0x10] sm:$0xff]
    %v111 = vld [vmem:[%s5 + $0x18] sm:$0xff]
    %v113 = vsel %vm47, %v106, 0
    %v116 = vsel %vm47, %v107, 0
    %118 = vmatpush.msra.mxu0 0.0
    %119 = vmatpush.msra.mxu0 0.0
    %120 = vmatpush.msra.mxu0 0.0
    %121 = vmatpush.msra.mxu0 0.0
    %122 = vmatpush.msra.mxu0 0.0
    %123 = vmatpush.msra.mxu0 0.0
    %124 = vmatpush.msra.mxu0 0.0
    %125 = vmatpush.msra.mxu0 0.0
    %126 = vmatpush.msra.mxu0 0.0
    %127 = vmatpush.msra.mxu0 0.0
    %128 = vmatpush.msra.mxu0 0.0
    %129 = vmatpush.msra.mxu0 0.0
    %130 = vmatpush.msra.mxu0 %v111
    %131 = vmatpush.msra.mxu0 %v110
    %132 = vmatpush.msra.mxu0 %v109
    %133 = vmatpush.msra.mxu0 %v108
    %134 = vmatmul.f32.gmra.mxu0 %v113
    %v135 = vpop.f32.mrf.mxu0
    %v136 = vadd.f32 0.0, %v135
    %137 = vmatmul.f32.gmra.mxu0 %v116
    %v138 = vpop.f32.mrf.mxu0
    %v139 = vadd.f32 0.0, %v138
    %140 = vdwg.mxu0
    %v141 = vld [vmem:[%s8] sm:$0xff]
    %vm142 = vcmask 15360
    %v144 = vsel %vm142, %v141, 0
    %vm146 = vcmask 1041408
    %v148 = vsel %vm146, %v69, 0
    %150 = vmatpush.msra.mxu0 0.0
    %151 = vmatpush.msra.mxu0 0.0
    %152 = vmatpush.msra.mxu0 0.0
    %153 = vmatpush.msra.mxu0 0.0
    %154 = vmatpush.msra.mxu0 0.0
    %155 = vmatpush.msra.mxu0 0.0
    %156 = vmatpush.msra.mxu0 0.0
    %157 = vmatpush.msra.mxu0 0.0
    %158 = vmatpush.msra.mxu0 0.0
    %159 = vmatpush.msra.mxu0 0.0
    %160 = vmatpush.msra.mxu0 0.0
    %161 = vmatpush.msra.mxu0 0.0
    %162 = vmatpush.msra.mxu0 0.0
    %163 = vmatpush.msra.mxu0 0.0
    %164 = vmatpush.msra.mxu0 0.0
    %165 = vmatpush.msra.mxu0 %v148
    %166 = vmatmul.f32.gmra.mxu0 %v144
    %v167 = vpop.f32.mrf.mxu0
    %v168 = vadd.f32 0.0, %v167
    %169 = vdwg.mxu0
    %v170 = vld [vmem:[%s9] sm:$0xff]
    %v171 = vmul.f32 %v168, %v170
    %v172 = vld [vmem:[%s10] sm:$0xff]
    %v174 = vsel %vm47, %v171, 0
    %v177 = vsel %vm47, %v101, 0
    %v180 = vsel %vm47, %v104, 0
    %182 = vmatpush.xpose.msra.mxu0 0.0
    %183 = vmatpush.xpose.msra.mxu0 0.0
    %184 = vmatpush.xpose.msra.mxu0 0.0
    %185 = vmatpush.xpose.msra.mxu0 0.0
    %186 = vmatpush.xpose.msra.mxu0 0.0
    %187 = vmatpush.xpose.msra.mxu0 0.0
    %188 = vmatpush.xpose.msra.mxu0 0.0
    %189 = vmatpush.xpose.msra.mxu0 0.0
    %190 = vmatpush.xpose.msra.mxu0 0.0
    %191 = vmatpush.xpose.msra.mxu0 0.0
    %192 = vmatpush.xpose.msra.mxu0 0.0
    %193 = vmatpush.xpose.msra.mxu0 0.0
    %194 = vmatpush.xpose.msra.mxu0 0.0
    %195 = vmatpush.xpose.msra.mxu0 0.0
    %196 = vmatpush.xpose.msra.mxu0 %v180
    %197 = vmatpush.xpose.msra.mxu0 %v177
    %198 = vmatmul.f32.gmra.mxu0 %v174
    %v199 = vpop.f32.mrf.mxu0
    %v200 = vadd.f32 %v172, %v199
    %201 = vdwg.mxu0
    %vm202 = vcmask 130048
    %v203 = vsel %vm202, %v200, -inf
    %204 = vmax.xlane.f32.xlu0 %v203
    %v205 = vpop.xlane.xlu0 %204
    %v206 = vsub.f32 %v200, %v205
    %v207 = vmul.f32 %v206, 1.442695
    %v208 = vpow.pop %v207
    %v209 = vsel %vm202, %v208, 0.0
    %210 = vadd.xlane.f32.xlu0 %v209
    %v211 = vpop.xlane.xlu0 %210
    %v212 = vrcp.pop %v211
    %v213 = vmul.f32 %v208, %v212
    %v215 = vsel %vm202, %v213, 0
    %217 = vmatpush.msra.mxu0 0.0
    %218 = vmatpush.msra.mxu0 0.0
    %219 = vmatpush.msra.mxu0 0.0
    %220 = vmatpush.msra.mxu0 0.0
    %221 = vmatpush.msra.mxu0 0.0
    %222 = vmatpush.msra.mxu0 0.0
    %223 = vmatpush.msra.mxu0 0.0
    %224 = vmatpush.msra.mxu0 0.0
    %225 = vmatpush.msra.mxu0 0.0
    %226 = vmatpush.msra.mxu0 0.0
    %227 = vmatpush.msra.mxu0 0.0
    %228 = vmatpush.msra.mxu0 0.0
    %229 = vmatpush.msra.mxu0 0.0
    %230 = vmatpush.msra.mxu0 0.0
    %231 = vmatpush.msra.mxu0 %v139
    %232 = vmatpush.msra.mxu0 %v136
    %233 = vmatmul.f32.gmra.mxu0 %v215
    %v234 = vpop.f32.mrf.mxu0
    %v235 = vadd.f32 0.0, %v234
    %236 = vdwg.mxu0
    %v237 = vmul.f32 %v235, %v170
    %v238 = vld [vmem:[%s11] sm:$0x3]
    %vm239 = vcmask 64512
    %v241 = vsel %vm239, %v238, 0
    %243 = vmatpush.msra.mxu0 0.0
    %244 = vmatpush.msra.mxu0 0.0
    %245 = vmatpush.msra.mxu0 0.0
    %246 = vmatpush.msra.mxu0 0.0
    %247 = vmatpush.msra.mxu0 0.0
    %248 = vmatpush.msra.mxu0 0.0
    %249 = vmatpush.msra.mxu0 0.0
    %250 = vmatpush.msra.mxu0 0.0
    %251 = vmatpush.msra.mxu0 0.0
    %252 = vmatpush.msra.mxu0 0.0
    %253 = vmatpush.msra.mxu0 0.0
    %254 = vmatpush.msra.mxu0 0.0
    %255 = vmatpush.msra.mxu0 0.0
    %256 = vmatpush.msra.mxu0 0.0
    %257 = vmatpush.msra.mxu0 0.0
    %258 = vmatpush.msra.mxu0 %v237
    %259 = vmatmul.f32.gmra.mxu0 %v241
    %v260 = vpop.f32.mrf.mxu0
    %v261 = vadd.f32 0.0, %v260
    %262 = vdwg.mxu0
    %v263 = vld [vmem:[%s6] sm:$0xff]
    %v264 = vld [vmem:[%s6 + $0x8] sm:$0xff]
    %v265 = vld [vmem:[%s6 + $0x10] sm:$0xff]
    %v266 = vld [vmem:[%s6 + $0x18] sm:$0xff]
    %v267 = vld [vmem:[%s7] sm:$0x1]
    %v269 = vperm.slane %v267, 0
    %v272 = vsel %vm47, %v261, 0
    %274 = vmatpush.msra.mxu0 0.0
    %275 = vmatpush.msra.mxu0 0.0
    %276 = vmatpush.msra.mxu0 0.0
    %277 = vmatpush.msra.mxu0 0.0
    %278 = vmatpush.msra.mxu0 0.0
    %279 = vmatpush.msra.mxu0 0.0
    %280 = vmatpush.msra.mxu0 0.0
    %281 = vmatpush.msra.mxu0 0.0
    %282 = vmatpush.msra.mxu0 0.0
    %283 = vmatpush.msra.mxu0 0.0
    %284 = vmatpush.msra.mxu0 0.0
    %285 = vmatpush.msra.mxu0 0.0
    %286 = vmatpush.msra.mxu0 %v266
    %287 = vmatpush.msra.mxu0 %v265
    %288 = vmatpush.msra.mxu0 %v264
    %289 = vmatpush.msra.mxu0 %v263
    %290 = vmatmul.f32.gmra.mxu0 %v272
    %v291 = vpop.f32.mrf.mxu0
    %v292 = vadd.f32 %v269, %v291
    %293 = vdwg.mxu0
    %vm294 = vcmask 254976
    %295 = vst.msk [vmem:[#allocation2] sm:$0x3] %vm294, %v292
    // Predicated region
    $region50: #{attention_forward.1} parent=1 // pred_check
      _
    $region51: #{attention_forward.1} parent=1 // pred_check_branch
      %297 = sbr.rel (0) target = $region53
    $region52: #{attention_forward.1} parent=1 // pred_region
      %299 = vsyncadd [#allocation3], 0
      %s301 = sshll.u32 [#allocation2], 4
      %s302 = int_to_ptr.vmem [resolvable:$true] %s301
      %s303 = sshll.u32 %s12, 4
      %s304 = int_to_ptr.hbm [resolvable:$true] %s303
      %306 = dma.vmem_to_hbm [thread:$0]  %s302, 32, %s304, [#allocation3]
    $region53: #{attention_forward.1} parent=1 // pred_fallthru
      _
    // Predicated region
    $region54: #{attention_forward.1} parent=1 // pred_check
      _
    $region55: #{attention_forward.1} parent=1 // pred_check_branch
      %308 = sbr.rel (0) target = $region57
    $region56: #{attention_forward.1} parent=1 // pred_region
      %310 = dma.done [#allocation3], 32
    $region57: #{attention_forward.1} parent=1 // pred_fallthru
      _
    %311 = vsyncpa [#allocation3], 1

</llo_original>
